<compile_context>
chip_gen: v7x
topology: tpu7x:2x2x1
jax: 0.10.0
libtpu: 0.0.40
codegen_flags: <defaults>
</compile_context>

<pallas_src>
import jax
import jax.numpy as jnp
from jax.experimental import pallas as pl
from jax.experimental.pallas import tpu as pltpu

LANE = 128     # TPU lane width
SUB = 8        # f32 sublane width
IN_PAD = 8     # x padded to 8 feature lanes (block last dim == full array dim)
OUT_PAD = 8    # output emitted with 8 lanes; real data in columns 0, 1
TB_MAX = 512   # max batch rows per grid step

# Row layout of the packed parameter tile (a single (16, 128) f32 VMEM tile).
ROW_W1I_0 = 0    # cnet_in  Linear(2,10): weight row for input feature 0
ROW_W1I_1 = 1    # cnet_in  Linear(2,10): weight row for input feature 1
ROW_B1I = 2      # cnet_in  Linear(2,10): bias
ROW_W2I_C0 = 3   # cnet_in  Linear(10,2): weight column 0 (laid out along lanes)
ROW_W2I_C1 = 4   # cnet_in  Linear(10,2): weight column 1
ROW_B2I = 5      # cnet_in  Linear(10,2): bias (lanes 0, 1)
ROW_QW = 6       # quantum weights qw0, qw1 (lanes 0, 1)
ROW_W1O_0 = 7    # cnet_out Linear(2,10): weight row for input feature 0
ROW_W1O_1 = 8    # cnet_out Linear(2,10): weight row for input feature 1
ROW_B1O = 9      # cnet_out Linear(2,10): bias
ROW_W2O_C0 = 10  # cnet_out Linear(10,2): weight column 0
ROW_W2O_C1 = 11  # cnet_out Linear(10,2): weight column 1
ROW_B2O = 12     # cnet_out Linear(10,2): bias (lanes 0, 1)
VEC_ROWS = 16    # padded to a sublane multiple


def hybrid_kernel(x_ref, p_ref, o_ref):
    x = x_ref[...]          # (TB, IN_PAD); real data in columns 0, 1
    p = p_ref[...]          # (VEC_ROWS, 128) packed parameters

    x0 = x[:, 0:1]
    x1 = x[:, 1:2]

    # cnet_in Linear(2,10) + ReLU as a VPU rank-2 update (K=2: no MXU needed).
    # Padded lanes (>= 10) of the weight rows / bias are zero, so h is zero there.
    h = jnp.maximum(
        x0 * p[ROW_W1I_0:ROW_W1I_0 + 1, :]
        + x1 * p[ROW_W1I_1:ROW_W1I_1 + 1, :]
        + p[ROW_B1I:ROW_B1I + 1, :],
        0.0)                                            # (TB, 128)

    # cnet_in Linear(10,2) + Tanh: two cross-lane (XLU) reductions; the
    # zero-padded lanes of h / weight columns contribute exactly 0.
    t0 = jnp.tanh(
        jnp.sum(h * p[ROW_W2I_C0:ROW_W2I_C0 + 1, :], axis=-1, keepdims=True)
        + p[ROW_B2I:ROW_B2I + 1, 0:1])                  # (TB, 1)
    t1 = jnp.tanh(
        jnp.sum(h * p[ROW_W2I_C1:ROW_W2I_C1 + 1, :], axis=-1, keepdims=True)
        + p[ROW_B2I:ROW_B2I + 1, 1:2])                  # (TB, 1)

    # Quantum layer: analytic 2-qubit expectation values.  The qw lanes are
    # addressed explicitly, so nothing relies on the padding of the qw row.
    neg_sin_qw = -jnp.sin(p[ROW_QW:ROW_QW + 1, :])      # (1, 128); lanes 0,1 used
    c0 = jnp.cos(2.0 * t0)
    c1 = jnp.cos(2.0 * t1)
    q0 = neg_sin_qw[:, 0:1] * c0 * c1                   # <Z0>, (TB, 1)
    q1 = neg_sin_qw[:, 1:2] * c1                        # <Z1>, (TB, 1)

    # cnet_out Linear(2,10) + ReLU (VPU rank-2 update again).
    h2 = jnp.maximum(
        q0 * p[ROW_W1O_0:ROW_W1O_0 + 1, :]
        + q1 * p[ROW_W1O_1:ROW_W1O_1 + 1, :]
        + p[ROW_B1O:ROW_B1O + 1, :],
        0.0)                                            # (TB, 128)

    # cnet_out Linear(10,2) + Tanh, then scatter the two results into the
    # 8-lane output tile (padded output lanes are written as exact zeros).
    o0 = jnp.tanh(
        jnp.sum(h2 * p[ROW_W2O_C0:ROW_W2O_C0 + 1, :], axis=-1, keepdims=True)
        + p[ROW_B2O:ROW_B2O + 1, 0:1])
    o1 = jnp.tanh(
        jnp.sum(h2 * p[ROW_W2O_C1:ROW_W2O_C1 + 1, :], axis=-1, keepdims=True)
        + p[ROW_B2O:ROW_B2O + 1, 1:2])
    col = jax.lax.broadcasted_iota(jnp.int32, o_ref.shape, 1)
    o_ref[...] = jnp.where(col == 0, o0, 0.0) + jnp.where(col == 1, o1, 0.0)


def pack_params(params):
    """Pad & pack all model parameters once into a single (16, 128) f32 tile.

    Hoisted out of the per-call path: only activations are padded per call.
    """
    (w1i, b1i, w2i, b2i, qw, w1o, b1o, w2o, b2o) = params
    f32 = jnp.float32
    p = jnp.zeros((VEC_ROWS, LANE), f32)
    p = p.at[ROW_W1I_0, : w1i.shape[1]].set(w1i[0].astype(f32))
    p = p.at[ROW_W1I_1, : w1i.shape[1]].set(w1i[1].astype(f32))
    p = p.at[ROW_B1I, : b1i.shape[0]].set(b1i.astype(f32))
    p = p.at[ROW_W2I_C0, : w2i.shape[0]].set(w2i[:, 0].astype(f32))
    p = p.at[ROW_W2I_C1, : w2i.shape[0]].set(w2i[:, 1].astype(f32))
    p = p.at[ROW_B2I, : b2i.shape[0]].set(b2i.astype(f32))
    p = p.at[ROW_QW, : qw.shape[0]].set(qw.astype(f32))
    p = p.at[ROW_W1O_0, : w1o.shape[1]].set(w1o[0].astype(f32))
    p = p.at[ROW_W1O_1, : w1o.shape[1]].set(w1o[1].astype(f32))
    p = p.at[ROW_B1O, : b1o.shape[0]].set(b1o.astype(f32))
    p = p.at[ROW_W2O_C0, : w2o.shape[0]].set(w2o[:, 0].astype(f32))
    p = p.at[ROW_W2O_C1, : w2o.shape[0]].set(w2o[:, 1].astype(f32))
    p = p.at[ROW_B2O, : b2o.shape[0]].set(b2o.astype(f32))
    return p


def _round_up(n, m):
    return ((n + m - 1) // m) * m


def _vmem_limit_bytes(tb):
    # double-buffered x/out tiles + resident packed params + f32 working set
    per_block = 4 * (2 * tb * (IN_PAD + OUT_PAD)
                     + 2 * VEC_ROWS * LANE
                     + 8 * tb * LANE)
    # generous headroom; well below 64 MiB (v7x) / 128 MiB (v5e, v6e) physical
    return int(min(32 * 1024 * 1024, max(8 * 1024 * 1024, 2 * per_block)))


@jax.jit
def hybrid_forward(x, packed_params):
    batch = x.shape[0]
    tb = min(TB_MAX, _round_up(batch, SUB))
    bp = _round_up(batch, tb)

    # Per-call padding is limited to the activation stream:
    # rows up to a tile multiple, features to 8 lanes.
    x_p = jnp.zeros((bp, IN_PAD), jnp.float32)
    x_p = x_p.at[:batch, : x.shape[1]].set(x.astype(jnp.float32))

    out = pl.pallas_call(
        hybrid_kernel,
        out_shape=jax.ShapeDtypeStruct((bp, OUT_PAD), jnp.float32),
        grid_spec=pltpu.PrefetchScalarGridSpec(
            num_scalar_prefetch=0,
            grid=(bp // tb,),
            in_specs=[
                pl.BlockSpec((tb, IN_PAD), lambda i: (i, 0)),
                pl.BlockSpec((VEC_ROWS, LANE), lambda i: (0, 0)),  # resident
            ],
            out_specs=pl.BlockSpec((tb, OUT_PAD), lambda i: (i, 0)),
        ),
        compiler_params=pltpu.CompilerParams(
            dimension_semantics=("parallel",),
            vmem_limit_bytes=_vmem_limit_bytes(tb),
        ),
    )(x_p, packed_params)

    # Rows >= batch and columns >= 2 are padding; never expose them downstream.
    return out[:batch, :2]


def ref_forward(x, params):
    """Pure-JAX reference (HIGHEST matmul precision -> true f32 math)."""
    (w1i, b1i, w2i, b2i, qw, w1o, b1o, w2o, b2o) = params
    hp = jax.lax.Precision.HIGHEST
    h = jnp.maximum(jnp.matmul(x, w1i, precision=hp) + b1i, 0.0)
    t = jnp.tanh(jnp.matmul(h, w2i, precision=hp) + b2i)
    q0 = -jnp.sin(qw[0]) * jnp.cos(2.0 * t[:, 0]) * jnp.cos(2.0 * t[:, 1])
    q1 = -jnp.sin(qw[1]) * jnp.cos(2.0 * t[:, 1])
    q = jnp.stack([q0, q1], axis=-1)
    h2 = jnp.maximum(jnp.matmul(q, w1o, precision=hp) + b1o, 0.0)
    return jnp.tanh(jnp.matmul(h2, w2o, precision=hp) + b2o)


def init_linear(key, fan_in, fan_out):
    # PyTorch nn.Linear default init: U(-1/sqrt(fan_in), 1/sqrt(fan_in)),
    # stored here as (in_features, out_features) so the forward is x @ W + b.
    k_w, k_b = jax.random.split(key)
    bound = 1.0 / float(fan_in) ** 0.5
    w = jax.random.uniform(k_w, (fan_in, fan_out), jnp.float32, -bound, bound)
    b = jax.random.uniform(k_b, (fan_out,), jnp.float32, -bound, bound)
    return w, b


if __name__ == "__main__":
    key = jax.random.PRNGKey(0)
    k_x1, k_x2, k1, k2, k3, k4, kq = jax.random.split(key, 7)

    w1i, b1i = init_linear(k1, 2, 10)
    w2i, b2i = init_linear(k2, 10, 2)
    w1o, b1o = init_linear(k3, 2, 10)
    w2o, b2o = init_linear(k4, 10, 2)
    # TorchLayer default weight init: U(0, 2*pi)
    qw = jax.random.uniform(kq, (2,), jnp.float32, 0.0, 2.0 * jnp.pi)
    params = (w1i, b1i, w2i, b2i, qw, w1o, b1o, w2o, b2o)

    packed = pack_params(params)   # pad/pack parameters once, reuse every call

    # Small batch: single grid step.
    x_small = jax.random.normal(k_x1, (8, 2), jnp.float32)
    out_small = jax.block_until_ready(hybrid_forward(x_small, packed))
    ref_small = ref_forward(x_small, params)
    assert out_small.shape == (8, 2)
    assert jnp.allclose(out_small, ref_small, atol=1e-4, rtol=1e-4), \
        "kernel != reference (small batch)"

    # Larger batch: exercises the tiled batch grid (3 steps) and row padding.
    x_big = jax.random.normal(k_x2, (1200, 2), jnp.float32)
    out_big = jax.block_until_ready(hybrid_forward(x_big, packed))
    ref_big = ref_forward(x_big, params)
    assert out_big.shape == (1200, 2)
    assert jnp.allclose(out_big, ref_big, atol=1e-4, rtol=1e-4), \
        "kernel != reference (large batch)"

    print("KERNEL_OK")
</pallas_src>

<mosaic_0001>
module attributes {stable_mosaic.version = 11 : i64} {
  func.func @hybrid_kernel(%arg0: i32, %arg1: memref<8x8xf32, #tpu.memory_space<vmem>>, %arg2: memref<16x128xf32, #tpu.memory_space<vmem>>, %arg3: memref<8x8xf32, #tpu.memory_space<vmem>>) attributes {dimension_semantics = [#tpu.dimension_semantics<parallel>], iteration_bounds = array<i64: 1>, scalar_prefetch = 0 : i64, scratch_operands = 0 : i64, tpu.core_type = #tpu.core_type<tc>, window_params = [{transform_indices = @transform_0, window_bounds = array<i64: 8, 8>}, {pipeline_mode = #tpu.pipeline_mode<synchronous>, transform_indices = @transform_1, window_bounds = array<i64: 16, 128>}, {transform_indices = @transform_2, window_bounds = array<i64: 8, 8>}]} {
    %c0 = arith.constant 0 : index
    %c0_0 = arith.constant 0 : index
    %0 = vector.load %arg1[%c0, %c0_0] : memref<8x8xf32, #tpu.memory_space<vmem>>, vector<8x8xf32>
    %c0_1 = arith.constant 0 : index
    %c0_2 = arith.constant 0 : index
    %1 = vector.load %arg2[%c0_1, %c0_2] : memref<16x128xf32, #tpu.memory_space<vmem>>, vector<16x128xf32>
    %2 = vector.extract_strided_slice %0 {offsets = [0, 0], sizes = [8, 1], strides = [1, 1]} : vector<8x8xf32> to vector<8x1xf32>
    %3 = vector.extract_strided_slice %0 {offsets = [0, 1], sizes = [8, 1], strides = [1, 1]} : vector<8x8xf32> to vector<8x1xf32>
    %4 = vector.extract_strided_slice %1 {offsets = [0, 0], sizes = [1, 128], strides = [1, 1]} : vector<16x128xf32> to vector<1x128xf32>
    %5 = vector.broadcast %2 : vector<8x1xf32> to vector<8x128xf32>
    %6 = vector.broadcast %4 : vector<1x128xf32> to vector<8x128xf32>
    %7 = arith.mulf %5, %6 : vector<8x128xf32>
    %8 = vector.extract_strided_slice %1 {offsets = [1, 0], sizes = [1, 128], strides = [1, 1]} : vector<16x128xf32> to vector<1x128xf32>
    %9 = vector.broadcast %3 : vector<8x1xf32> to vector<8x128xf32>
    %10 = vector.broadcast %8 : vector<1x128xf32> to vector<8x128xf32>
    %11 = arith.mulf %9, %10 : vector<8x128xf32>
    %12 = arith.addf %7, %11 : vector<8x128xf32>
    %13 = vector.extract_strided_slice %1 {offsets = [2, 0], sizes = [1, 128], strides = [1, 1]} : vector<16x128xf32> to vector<1x128xf32>
    %14 = vector.broadcast %13 : vector<1x128xf32> to vector<8x128xf32>
    %15 = arith.addf %12, %14 : vector<8x128xf32>
    %cst = arith.constant 0.000000e+00 : f32
    %16 = vector.broadcast %cst : f32 to vector<8x128xf32>
    %17 = arith.maximumf %15, %16 : vector<8x128xf32>
    %18 = vector.extract_strided_slice %1 {offsets = [3, 0], sizes = [1, 128], strides = [1, 1]} : vector<16x128xf32> to vector<1x128xf32>
    %19 = vector.broadcast %18 : vector<1x128xf32> to vector<8x128xf32>
    %20 = arith.mulf %17, %19 : vector<8x128xf32>
    %cst_3 = arith.constant dense<0.000000e+00> : vector<8xf32>
    %21 = vector.multi_reduction <add>, %20, %cst_3 [1] : vector<8x128xf32> to vector<8xf32>
    %22 = vector.shape_cast %21 : vector<8xf32> to vector<8x1xf32>
    %23 = vector.extract_strided_slice %1 {offsets = [5, 0], sizes = [1, 1], strides = [1, 1]} : vector<16x128xf32> to vector<1x1xf32>
    %24 = vector.broadcast %23 : vector<1x1xf32> to vector<8x1xf32>
    %25 = arith.addf %22, %24 : vector<8x1xf32>
    %26 = math.tanh %25 : vector<8x1xf32>
    %27 = vector.extract_strided_slice %1 {offsets = [4, 0], sizes = [1, 128], strides = [1, 1]} : vector<16x128xf32> to vector<1x128xf32>
    %28 = vector.broadcast %27 : vector<1x128xf32> to vector<8x128xf32>
    %29 = arith.mulf %17, %28 : vector<8x128xf32>
    %cst_4 = arith.constant dense<0.000000e+00> : vector<8xf32>
    %30 = vector.multi_reduction <add>, %29, %cst_4 [1] : vector<8x128xf32> to vector<8xf32>
    %31 = vector.shape_cast %30 : vector<8xf32> to vector<8x1xf32>
    %32 = vector.extract_strided_slice %1 {offsets = [5, 1], sizes = [1, 1], strides = [1, 1]} : vector<16x128xf32> to vector<1x1xf32>
    %33 = vector.broadcast %32 : vector<1x1xf32> to vector<8x1xf32>
    %34 = arith.addf %31, %33 : vector<8x1xf32>
    %35 = math.tanh %34 : vector<8x1xf32>
    %36 = vector.extract_strided_slice %1 {offsets = [6, 0], sizes = [1, 128], strides = [1, 1]} : vector<16x128xf32> to vector<1x128xf32>
    %37 = math.sin %36 : vector<1x128xf32>
    %cst_5 = arith.constant 0.000000e+00 : f32
    %38 = vector.broadcast %cst_5 : f32 to vector<1x128xf32>
    %39 = arith.subf %38, %37 : vector<1x128xf32>
    %cst_6 = arith.constant 2.000000e+00 : f32
    %40 = vector.broadcast %cst_6 : f32 to vector<8x1xf32>
    %41 = arith.mulf %40, %26 : vector<8x1xf32>
    %42 = math.cos %41 : vector<8x1xf32>
    %cst_7 = arith.constant 2.000000e+00 : f32
    %43 = vector.broadcast %cst_7 : f32 to vector<8x1xf32>
    %44 = arith.mulf %43, %35 : vector<8x1xf32>
    %45 = math.cos %44 : vector<8x1xf32>
    %46 = vector.extract_strided_slice %39 {offsets = [0, 0], sizes = [1, 1], strides = [1, 1]} : vector<1x128xf32> to vector<1x1xf32>
    %47 = vector.broadcast %46 : vector<1x1xf32> to vector<8x1xf32>
    %48 = arith.mulf %47, %42 : vector<8x1xf32>
    %49 = arith.mulf %48, %45 : vector<8x1xf32>
    %50 = vector.extract_strided_slice %39 {offsets = [0, 1], sizes = [1, 1], strides = [1, 1]} : vector<1x128xf32> to vector<1x1xf32>
    %51 = vector.broadcast %50 : vector<1x1xf32> to vector<8x1xf32>
    %52 = arith.mulf %51, %45 : vector<8x1xf32>
    %53 = vector.extract_strided_slice %1 {offsets = [7, 0], sizes = [1, 128], strides = [1, 1]} : vector<16x128xf32> to vector<1x128xf32>
    %54 = vector.broadcast %49 : vector<8x1xf32> to vector<8x128xf32>
    %55 = vector.broadcast %53 : vector<1x128xf32> to vector<8x128xf32>
    %56 = arith.mulf %54, %55 : vector<8x128xf32>
    %57 = vector.extract_strided_slice %1 {offsets = [8, 0], sizes = [1, 128], strides = [1, 1]} : vector<16x128xf32> to vector<1x128xf32>
    %58 = vector.broadcast %52 : vector<8x1xf32> to vector<8x128xf32>
    %59 = vector.broadcast %57 : vector<1x128xf32> to vector<8x128xf32>
    %60 = arith.mulf %58, %59 : vector<8x128xf32>
    %61 = arith.addf %56, %60 : vector<8x128xf32>
    %62 = vector.extract_strided_slice %1 {offsets = [9, 0], sizes = [1, 128], strides = [1, 1]} : vector<16x128xf32> to vector<1x128xf32>
    %63 = vector.broadcast %62 : vector<1x128xf32> to vector<8x128xf32>
    %64 = arith.addf %61, %63 : vector<8x128xf32>
    %cst_8 = arith.constant 0.000000e+00 : f32
    %65 = vector.broadcast %cst_8 : f32 to vector<8x128xf32>
    %66 = arith.maximumf %64, %65 : vector<8x128xf32>
    %67 = vector.extract_strided_slice %1 {offsets = [10, 0], sizes = [1, 128], strides = [1, 1]} : vector<16x128xf32> to vector<1x128xf32>
    %68 = vector.broadcast %67 : vector<1x128xf32> to vector<8x128xf32>
    %69 = arith.mulf %66, %68 : vector<8x128xf32>
    %cst_9 = arith.constant dense<0.000000e+00> : vector<8xf32>
    %70 = vector.multi_reduction <add>, %69, %cst_9 [1] : vector<8x128xf32> to vector<8xf32>
    %71 = vector.shape_cast %70 : vector<8xf32> to vector<8x1xf32>
    %72 = vector.extract_strided_slice %1 {offsets = [12, 0], sizes = [1, 1], strides = [1, 1]} : vector<16x128xf32> to vector<1x1xf32>
    %73 = vector.broadcast %72 : vector<1x1xf32> to vector<8x1xf32>
    %74 = arith.addf %71, %73 : vector<8x1xf32>
    %75 = math.tanh %74 : vector<8x1xf32>
    %76 = vector.extract_strided_slice %1 {offsets = [11, 0], sizes = [1, 128], strides = [1, 1]} : vector<16x128xf32> to vector<1x128xf32>
    %77 = vector.broadcast %76 : vector<1x128xf32> to vector<8x128xf32>
    %78 = arith.mulf %66, %77 : vector<8x128xf32>
    %cst_10 = arith.constant dense<0.000000e+00> : vector<8xf32>
    %79 = vector.multi_reduction <add>, %78, %cst_10 [1] : vector<8x128xf32> to vector<8xf32>
    %80 = vector.shape_cast %79 : vector<8xf32> to vector<8x1xf32>
    %81 = vector.extract_strided_slice %1 {offsets = [12, 1], sizes = [1, 1], strides = [1, 1]} : vector<16x128xf32> to vector<1x1xf32>
    %82 = vector.broadcast %81 : vector<1x1xf32> to vector<8x1xf32>
    %83 = arith.addf %80, %82 : vector<8x1xf32>
    %84 = math.tanh %83 : vector<8x1xf32>
    %85 = tpu.iota {dimensions = array<i32: 1>} : vector<8x8xi32>
    %c0_i32 = arith.constant 0 : i32
    %86 = vector.broadcast %c0_i32 : i32 to vector<8x8xi32>
    %87 = arith.cmpi eq, %85, %86 : vector<8x8xi32>
    %cst_11 = arith.constant 0.000000e+00 : f32
    %88 = vector.shape_cast %75 : vector<8x1xf32> to vector<8x1xf32>
    %89 = vector.broadcast %88 : vector<8x1xf32> to vector<8x8xf32>
    %90 = vector.broadcast %cst_11 : f32 to vector<8x8xf32>
    %91 = arith.select %87, %89, %90 : vector<8x8xi1>, vector<8x8xf32>
    %c1_i32 = arith.constant 1 : i32
    %92 = vector.broadcast %c1_i32 : i32 to vector<8x8xi32>
    %93 = arith.cmpi eq, %85, %92 : vector<8x8xi32>
    %cst_12 = arith.constant 0.000000e+00 : f32
    %94 = vector.shape_cast %84 : vector<8x1xf32> to vector<8x1xf32>
    %95 = vector.broadcast %94 : vector<8x1xf32> to vector<8x8xf32>
    %96 = vector.broadcast %cst_12 : f32 to vector<8x8xf32>
    %97 = arith.select %93, %95, %96 : vector<8x8xi1>, vector<8x8xf32>
    %98 = arith.addf %91, %97 : vector<8x8xf32>
    %c0_13 = arith.constant 0 : index
    %c0_14 = arith.constant 0 : index
    %99 = vector.load %arg3[%c0_13, %c0_14] : memref<8x8xf32, #tpu.memory_space<vmem>>, vector<8x8xf32>
    tpu.vector_store %arg3[%c0_13, %c0_14], %98 {strides = array<i32>} : memref<8x8xf32, #tpu.memory_space<vmem>>, vector<8x8xf32>,
    return
  }
  func.func @transform_0(%arg0: i32) -> (i32, i32) {
    %c0_i32 = arith.constant 0 : i32
    %c0_i32_0 = arith.constant 0 : i32
    return %arg0, %c0_i32 : i32, i32
  }
  func.func @transform_1(%arg0: i32) -> (i32, i32) {
    %c0_i32 = arith.constant 0 : i32
    %c0_i32_0 = arith.constant 0 : i32
    %c0_i32_1 = arith.constant 0 : i32
    return %c0_i32, %c0_i32_0 : i32, i32
  }
  func.func @transform_2(%arg0: i32) -> (i32, i32) {
    %c0_i32 = arith.constant 0 : i32
    %c0_i32_0 = arith.constant 0 : i32
    return %arg0, %c0_i32 : i32, i32
  }
}

</mosaic_0001>

<llo_original>
// kernel: hybrid_forward.1
$region0: #{hybrid_forward.1}
  #allocation0 [shape = 'u32[]', space=smem, size = 0x4, offset = 0x4, fixed_abs, tag = 'smem constant byte address 0x4 - core index']
  #allocation1 [shape = 'u32[144,128]{1,0:T(1,128)}', space=vmem, size = 0x12000, scoped, tag = 'internal scratch']
  %s0 = inlined_call_operand.vmem [shape: f32[8,8], index: 0, kind: input, shape index: {}]
  %s1 = inlined_call_operand.vmem [shape: f32[16,128], index: 1, kind: input, shape index: {}]
  %s2 = inlined_call_operand.vmem [shape: f32[8,8], index: 2, kind: output, shape index: {}]
  %s3 = sld [smem:[#allocation0]]
  $region18: #{hybrid_forward.1} parent=0
    _
  %s5 = ssub.s32 1, %s3
  %s6 = scalar_select 0, %s5, %s3
  // Predicated region
  $region2: #{hybrid_forward.1} parent=0 // pred_check
    _
  $region3: #{hybrid_forward.1} parent=0 // pred_check_branch
    %8 = sbr.rel (0) target = $region5
  $region4: #{hybrid_forward.1} parent=0 // pred_region
    _
  $region5: #{hybrid_forward.1} parent=0 // pred_fallthru
    _
  // Predicated region
  $region6: #{hybrid_forward.1} parent=0 // pred_check
    _
  $region7: #{hybrid_forward.1} parent=0 // pred_check_branch
    %10 = sbr.rel (0) target = $region9
  $region8: #{hybrid_forward.1} parent=0 // pred_region
    _
  $region9: #{hybrid_forward.1} parent=0 // pred_fallthru
    _
  %v11 = vld [vmem:[%s0] sm:$0xff]
  %v12 = vld [vmem:[%s1] sm:$0xff]
  %v13 = vld [vmem:[%s1 + $0x8] sm:$0xff]
  %15 = vset.pattern.permute.xlu0 0
  %16 = vperm.xlu0 %15, %v11
  %v17 = vpop.permute.xlu0 %16
  %v19 = vlaneseq
  %v20 = vshrl.u32 %v19, 7
  %v21 = vsub.s32 0, %v20
  %v22 = vrot.slane %v12, %v21
  %v23 = vmul.f32 %v17, %v22
  %24 = vset.pattern.permute.xlu0 1
  %25 = vperm.xlu0 %24, %v11
  %v26 = vpop.permute.xlu0 %25
  %v28 = vlaneseq
  %v29 = vshrl.u32 %v28, 7
  %v30 = vsub.s32 1, %v29
  %v31 = vrot.slane %v12, %v30
  %v32 = vmul.f32 %v26, %v31
  %v33 = vadd.f32 %v23, %v32
  %v34 = vlaneseq
  %v35 = vshrl.u32 %v34, 7
  %v36 = vsub.s32 2, %v35
  %v37 = vrot.slane %v12, %v36
  %v38 = vadd.f32 %v33, %v37
  %v39 = vmax.f32 %v38, 0.0
  %v40 = vlaneseq
  %v41 = vshrl.u32 %v40, 7
  %v42 = vsub.s32 3, %v41
  %v43 = vrot.slane %v12, %v42
  %v44 = vmul.f32 %v39, %v43
  %45 = vadd.xlane.f32.xlu0 %v44
  %v46 = vpop.xlane.xlu0 %45
  %v47 = vlaneseq
  %v48 = vshrl.u32 %v47, 7
  %v49 = vsub.s32 5, %v48
  %v50 = vrot.slane %v12, %v49
  %v51 = vadd.f32 %v46, %v50
  %v52 = vtanh.pop %v51
  %v53 = vlaneseq
  %v54 = vshrl.u32 %v53, 7
  %v55 = vsub.s32 4, %v54
  %v56 = vrot.slane %v12, %v55
  %v57 = vmul.f32 %v39, %v56
  %58 = vadd.xlane.f32.xlu0 %v57
  %v59 = vpop.xlane.xlu0 %58
  %v60 = vadd.f32 %v59, %v50
  %v61 = vtanh.pop %v60
  %v62 = vand.u32 2147483647, %v12
  %vm63 = vcmp.le.f32.partialorder %v62, 0.7853982
  %vm64 = vcmp.lt.s32.totalorder %v12, 0
  %v65 = vand.u32 %v12, 2139095040
  %v66 = vshrl.u32 %v65, 23
  %v67 = vsub.s32 %v66, 127
  %v68 = vand.u32 2147483647, %v12
  %v69 = vand.u32 %v68, 8388607
  %v70 = vor.u32 %v69, 8388608
  %v71 = vsub.s32 0, %v70
  %v72 = vadd.s32 %v67, 1
  %vm73 = vcmp.gt.s32.totalorder %v72, 0
  %v74 = vsel %vm73, %v72, 0
  %v75 = vshrl.u32 %v74, 5
  %v76 = vand.u32 %v74, 31
  %v77 = vsub.s32 32, %v76
  %v78 = vshrl.u32 683565275, %v77
  %v79 = vshll.u32 683565275, %v76
  %v80 = vshrl.u32 2475754826, %v77
  %v81 = vor.u32 %v79, %v80
  %v82 = vshll.u32 2475754826, %v76
  %v83 = vshrl.u32 2131351028, %v77
  %v84 = vor.u32 %v82, %v83
  %v85 = vshll.u32 2131351028, %v76
  %v86 = vshrl.u32 2102212464, %v77
  %v87 = vor.u32 %v85, %v86
  %v88 = vshll.u32 2102212464, %v76
  %v89 = vshrl.u32 920167782, %v77
  %v90 = vor.u32 %v88, %v89
  %v91 = vshll.u32 920167782, %v76
  %v92 = vshrl.u32 1326507024, %v77
  %v93 = vor.u32 %v91, %v92
  %vm94 = vcmp.lt.s32.totalorder %v75, 1
  %vm95 = vcmp.lt.s32.totalorder %v75, 2
  %vm96 = vcmp.lt.s32.totalorder %v75, 3
  %vm97 = vcmp.lt.s32.totalorder %v75, 4
  %v98 = vsel %vm94, %v78, %v81
  %v99 = vsel %vm97, %v87, 2102212464
  %v100 = vsel %vm96, %v84, %v99
  %v101 = vsel %vm95, %v98, %v100
  %v102 = vsel %vm94, %v81, %v84
  %v103 = vsel %vm97, %v90, 920167782
  %v104 = vsel %vm96, %v87, %v103
  %v105 = vsel %vm95, %v102, %v104
  %v106 = vsel %vm94, %v84, %v87
  %v107 = vsel %vm97, %v93, 1326507024
  %v108 = vsel %vm96, %v90, %v107
  %v109 = vsel %vm95, %v106, %v108
  %v110 = vshll.u32 %v70, 8
  %v111 = vmul.u32.u64.compose %v110, %v109
  %v112 = vextract.low.u32 %v111
  %v113 = vextract.high.u32 %v111
  %v114 = vmul.u32.u64.compose %v110, %v105
  %v115 = vextract.low.u32 %v114
  %v116 = vextract.high.u32 %v114
  %v117 = vmul.u32 %v110, %v101
  %v118 = vadd.s32 %v113, %v115
  %vm119 = vc.u32 %v113, %v115
  %v120 = vadd.s32 %v116, 1
  %v121 = vsel %vm119, %v120, %v116
  %v122 = vadd.s32 %v117, %v121
  %v123 = vadd.s32 %v122, 536870912
  %v124 = vshrl.u32 %v123, 30
  %v125 = vshll.u32 %v124, 30
  %v126 = vsub.s32 %v122, %v125
  %vm127 = vcmp.lt.s32.totalorder %v126, 0
  %v128 = vsub.s32 0, %v126
  %v129 = vsel %vm127, %v128, %v126
  %v130 = vclz %v129
  %v131 = vsub.s32 %v130, 2
  %vm132 = vcmp.gt.s32.totalorder 0, %v131
  %v133 = vsel %vm132, 0, %v131
  %v134 = vsub.s32 32, %v133
  %v135 = vshll.u32 %v126, %v133
  %v136 = vshrl.u32 %v118, %v134
  %v137 = vor.u32 %v135, %v136
  %v138 = vsub.s32 4294967266, %v133
  %v139 = vadd.s32 %v138, 127
  %v140 = vshll.u32 %v139, 23
  %v141 = vor.u32 4788187, %v140
  %v142 = vand.u32 2147483647, %v141
  %v144 = vcvt.s32.f32 %v137
  %v145 = vmul.f32 %v144, %v142
  %v146 = vxor.u32 %v145, 2147483648
  %v147 = vsel %vm64, %v146, %v145
  %v148 = vsub.s32 4, %v124
  %v149 = vsel %vm64, %v148, %v124
  %v150 = vsel %vm63, %v12, %v147
  %v151 = vsel %vm63, 0, %v149
  %v152 = vcosq.f32.pop %v150
  %v153 = vsinq.f32.pop %v150
  %vm154 = vweird.f32 %v12
  %v155 = vadd.s32 %v151, 3
  %v156 = vand.u32 %v155, 3
  %vm157 = vcmp.lt.s32.totalorder %v156, 2
  %vm158 = vcmp.eq.s32.totalorder %v156, 0
  %v159 = vxor.u32 %v153, 2147483648
  %v160 = vsel %vm158, %v152, %v159
  %vm161 = vcmp.eq.s32.totalorder %v156, 2
  %v162 = vxor.u32 %v152, 2147483648
  %v163 = vsel %vm161, %v162, %v153
  %v164 = vsel %vm157, %v160, %v163
  %v165 = vsel %vm154, nan, %v164
  %v166 = vsub.f32 0.0, %v165
  %v167 = vmul.f32 %v52, 2.0
  %v168 = vand.u32 2147483647, %v167
  %vm169 = vcmp.le.f32.partialorder %v168, 0.7853982
  %vm170 = vcmp.lt.s32.totalorder %v167, 0
  %v171 = vand.u32 %v167, 2139095040
  %v172 = vshrl.u32 %v171, 23
  %v173 = vsub.s32 %v172, 127
  %v174 = vand.u32 2147483647, %v167
  %v175 = vand.u32 %v174, 8388607
  %v176 = vor.u32 %v175, 8388608
  %v177 = vsub.s32 0, %v176
  %v178 = vadd.s32 %v173, 1
  %vm179 = vcmp.gt.s32.totalorder %v178, 0
  %v180 = vsel %vm179, %v178, 0
  %v181 = vshrl.u32 %v180, 5
  %v182 = vand.u32 %v180, 31
  %v183 = vsub.s32 32, %v182
  %v184 = vshrl.u32 683565275, %v183
  %v185 = vshll.u32 683565275, %v182
  %v186 = vshrl.u32 2475754826, %v183
  %v187 = vor.u32 %v185, %v186
  %v188 = vshll.u32 2475754826, %v182
  %v189 = vshrl.u32 2131351028, %v183
  %v190 = vor.u32 %v188, %v189
  %v191 = vshll.u32 2131351028, %v182
  %v192 = vshrl.u32 2102212464, %v183
  %v193 = vor.u32 %v191, %v192
  %v194 = vshll.u32 2102212464, %v182
  %v195 = vshrl.u32 920167782, %v183
  %v196 = vor.u32 %v194, %v195
  %v197 = vshll.u32 920167782, %v182
  %v198 = vshrl.u32 1326507024, %v183
  %v199 = vor.u32 %v197, %v198
  %vm200 = vcmp.lt.s32.totalorder %v181, 1
  %vm201 = vcmp.lt.s32.totalorder %v181, 2
  %vm202 = vcmp.lt.s32.totalorder %v181, 3
  %vm203 = vcmp.lt.s32.totalorder %v181, 4
  %v204 = vsel %vm200, %v184, %v187
  %v205 = vsel %vm203, %v193, 2102212464
  %v206 = vsel %vm202, %v190, %v205
  %v207 = vsel %vm201, %v204, %v206
  %v208 = vsel %vm200, %v187, %v190
  %v209 = vsel %vm203, %v196, 920167782
  %v210 = vsel %vm202, %v193, %v209
  %v211 = vsel %vm201, %v208, %v210
  %v212 = vsel %vm200, %v190, %v193
  %v213 = vsel %vm203, %v199, 1326507024
  %v214 = vsel %vm202, %v196, %v213
  %v215 = vsel %vm201, %v212, %v214
  %v216 = vshll.u32 %v176, 8
  %v217 = vmul.u32.u64.compose %v216, %v215
  %v218 = vextract.low.u32 %v217
  %v219 = vextract.high.u32 %v217
  %v220 = vmul.u32.u64.compose %v216, %v211
  %v221 = vextract.low.u32 %v220
  %v222 = vextract.high.u32 %v220
  %v223 = vmul.u32 %v216, %v207
  %v224 = vadd.s32 %v219, %v221
  %vm225 = vc.u32 %v219, %v221
  %v226 = vadd.s32 %v222, 1
  %v227 = vsel %vm225, %v226, %v222
  %v228 = vadd.s32 %v223, %v227
  %v229 = vadd.s32 %v228, 536870912
  %v230 = vshrl.u32 %v229, 30
  %v231 = vshll.u32 %v230, 30
  %v232 = vsub.s32 %v228, %v231
  %vm233 = vcmp.lt.s32.totalorder %v232, 0
  %v234 = vsub.s32 0, %v232
  %v235 = vsel %vm233, %v234, %v232
  %v236 = vclz %v235
  %v237 = vsub.s32 %v236, 2
  %vm238 = vcmp.gt.s32.totalorder 0, %v237
  %v239 = vsel %vm238, 0, %v237
  %v240 = vsub.s32 32, %v239
  %v241 = vshll.u32 %v232, %v239
  %v242 = vshrl.u32 %v224, %v240
  %v243 = vor.u32 %v241, %v242
  %v244 = vsub.s32 4294967266, %v239
  %v245 = vadd.s32 %v244, 127
  %v246 = vshll.u32 %v245, 23
  %v247 = vor.u32 4788187, %v246
  %v248 = vand.u32 2147483647, %v247
  %v250 = vcvt.s32.f32 %v243
  %v251 = vmul.f32 %v250, %v248
  %v252 = vxor.u32 %v251, 2147483648
  %v253 = vsel %vm170, %v252, %v251
  %v254 = vsub.s32 4, %v230
  %v255 = vsel %vm170, %v254, %v230
  %v256 = vsel %vm169, %v167, %v253
  %v257 = vsel %vm169, 0, %v255
  %v258 = vcosq.f32.pop %v256
  %v259 = vsinq.f32.pop %v256
  %vm260 = vweird.f32 %v167
  %v261 = vand.u32 %v257, 3
  %vm262 = vcmp.lt.s32.totalorder %v261, 2
  %vm263 = vcmp.eq.s32.totalorder %v261, 0
  %v264 = vxor.u32 %v259, 2147483648
  %v265 = vsel %vm263, %v258, %v264
  %vm266 = vcmp.eq.s32.totalorder %v261, 2
  %v267 = vxor.u32 %v258, 2147483648
  %v268 = vsel %vm266, %v267, %v259
  %v269 = vsel %vm262, %v265, %v268
  %v270 = vsel %vm260, nan, %v269
  %v271 = vmul.f32 %v61, 2.0
  %v272 = vand.u32 2147483647, %v271
  %vm273 = vcmp.le.f32.partialorder %v272, 0.7853982
  %vm274 = vcmp.lt.s32.totalorder %v271, 0
  %v275 = vand.u32 %v271, 2139095040
  %v276 = vshrl.u32 %v275, 23
  %v277 = vsub.s32 %v276, 127
  %v278 = vand.u32 2147483647, %v271
  %v279 = vand.u32 %v278, 8388607
  %v280 = vor.u32 %v279, 8388608
  %v281 = vsub.s32 0, %v280
  %v282 = vadd.s32 %v277, 1
  %vm283 = vcmp.gt.s32.totalorder %v282, 0
  %v284 = vsel %vm283, %v282, 0
  %v285 = vshrl.u32 %v284, 5
  %v286 = vand.u32 %v284, 31
  %v287 = vsub.s32 32, %v286
  %v288 = vshrl.u32 683565275, %v287
  %v289 = vshll.u32 683565275, %v286
  %v290 = vshrl.u32 2475754826, %v287
  %v291 = vor.u32 %v289, %v290
  %v292 = vshll.u32 2475754826, %v286
  %v293 = vshrl.u32 2131351028, %v287
  %v294 = vor.u32 %v292, %v293
  %v295 = vshll.u32 2131351028, %v286
  %v296 = vshrl.u32 2102212464, %v287
  %v297 = vor.u32 %v295, %v296
  %v298 = vshll.u32 2102212464, %v286
  %v299 = vshrl.u32 920167782, %v287
  %v300 = vor.u32 %v298, %v299
  %v301 = vshll.u32 920167782, %v286
  %v302 = vshrl.u32 1326507024, %v287
  %v303 = vor.u32 %v301, %v302
  %vm304 = vcmp.lt.s32.totalorder %v285, 1
  %vm305 = vcmp.lt.s32.totalorder %v285, 2
  %vm306 = vcmp.lt.s32.totalorder %v285, 3
  %vm307 = vcmp.lt.s32.totalorder %v285, 4
  %v308 = vsel %vm304, %v288, %v291
  %v309 = vsel %vm307, %v297, 2102212464
  %v310 = vsel %vm306, %v294, %v309
  %v311 = vsel %vm305, %v308, %v310
  %v312 = vsel %vm304, %v291, %v294
  %v313 = vsel %vm307, %v300, 920167782
  %v314 = vsel %vm306, %v297, %v313
  %v315 = vsel %vm305, %v312, %v314
  %v316 = vsel %vm304, %v294, %v297
  %v317 = vsel %vm307, %v303, 1326507024
  %v318 = vsel %vm306, %v300, %v317
  %v319 = vsel %vm305, %v316, %v318
  %v320 = vshll.u32 %v280, 8
  %v321 = vmul.u32.u64.compose %v320, %v319
  %v322 = vextract.low.u32 %v321
  %v323 = vextract.high.u32 %v321
  %v324 = vmul.u32.u64.compose %v320, %v315
  %v325 = vextract.low.u32 %v324
  %v326 = vextract.high.u32 %v324
  %v327 = vmul.u32 %v320, %v311
  %v328 = vadd.s32 %v323, %v325
  %vm329 = vc.u32 %v323, %v325
  %v330 = vadd.s32 %v326, 1
  %v331 = vsel %vm329, %v330, %v326
  %v332 = vadd.s32 %v327, %v331
  %v333 = vadd.s32 %v332, 536870912
  %v334 = vshrl.u32 %v333, 30
  %v335 = vshll.u32 %v334, 30
  %v336 = vsub.s32 %v332, %v335
  %vm337 = vcmp.lt.s32.totalorder %v336, 0
  %v338 = vsub.s32 0, %v336
  %v339 = vsel %vm337, %v338, %v336
  %v340 = vclz %v339
  %v341 = vsub.s32 %v340, 2
  %vm342 = vcmp.gt.s32.totalorder 0, %v341
  %v343 = vsel %vm342, 0, %v341
  %v344 = vsub.s32 32, %v343
  %v345 = vshll.u32 %v336, %v343
  %v346 = vshrl.u32 %v328, %v344
  %v347 = vor.u32 %v345, %v346
  %v348 = vsub.s32 4294967266, %v343
  %v349 = vadd.s32 %v348, 127
  %v350 = vshll.u32 %v349, 23
  %v351 = vor.u32 4788187, %v350
  %v352 = vand.u32 2147483647, %v351
  %v354 = vcvt.s32.f32 %v347
  %v355 = vmul.f32 %v354, %v352
  %v356 = vxor.u32 %v355, 2147483648
  %v357 = vsel %vm274, %v356, %v355
  %v358 = vsub.s32 4, %v334
  %v359 = vsel %vm274, %v358, %v334
  %v360 = vsel %vm273, %v271, %v357
  %v361 = vsel %vm273, 0, %v359
  %v362 = vcosq.f32.pop %v360
  %v363 = vsinq.f32.pop %v360
  %vm364 = vweird.f32 %v271
  %v365 = vand.u32 %v361, 3
  %vm366 = vcmp.lt.s32.totalorder %v365, 2
  %vm367 = vcmp.eq.s32.totalorder %v365, 0
  %v368 = vxor.u32 %v363, 2147483648
  %v369 = vsel %vm367, %v362, %v368
  %vm370 = vcmp.eq.s32.totalorder %v365, 2
  %v371 = vxor.u32 %v362, 2147483648
  %v372 = vsel %vm370, %v371, %v363
  %v373 = vsel %vm366, %v369, %v372
  %v374 = vsel %vm364, nan, %v373
  %v375 = vlaneseq
  %v376 = vshrl.u32 %v375, 7
  %v377 = vsub.s32 6, %v376
  %v378 = vrot.slane %v166, %v377
  %v379 = vmul.f32 %v378, %v270
  %381 = vrot.lane.b32.xlu0 %v374, 127
  %v382 = vpop.permute.xlu0 %381
  %v384 = vmul.f32 %v379, %v382
  %v385 = vmul.f32 %v378, %v374
  %387 = vset.pattern.permute.xlu0 0
  %388 = vperm.xlu0 %387, %v384
  %v389 = vpop.permute.xlu0 %388
  %v391 = vlaneseq
  %v392 = vshrl.u32 %v391, 7
  %v393 = vsub.s32 7, %v392
  %v394 = vrot.slane %v12, %v393
  %v395 = vmul.f32 %v389, %v394
  %397 = vset.pattern.permute.xlu0 1
  %398 = vperm.xlu0 %397, %v385
  %v399 = vpop.permute.xlu0 %398
  %v401 = vlaneseq
  %v402 = vshrl.u32 %v401, 7
  %v403 = vsub.s32 0, %v402
  %v404 = vrot.slane %v13, %v403
  %v405 = vmul.f32 %v399, %v404
  %v406 = vadd.f32 %v395, %v405
  %v407 = vlaneseq
  %v408 = vshrl.u32 %v407, 7
  %v409 = vsub.s32 1, %v408
  %v410 = vrot.slane %v13, %v409
  %v411 = vadd.f32 %v406, %v410
  %v412 = vmax.f32 %v411, 0.0
  %v413 = vlaneseq
  %v414 = vshrl.u32 %v413, 7
  %v415 = vsub.s32 2, %v414
  %v416 = vrot.slane %v13, %v415
  %v417 = vmul.f32 %v412, %v416
  %418 = vadd.xlane.f32.xlu0 %v417
  %v419 = vpop.xlane.xlu0 %418
  %v420 = vlaneseq
  %v421 = vshrl.u32 %v420, 7
  %v422 = vsub.s32 4, %v421
  %v423 = vrot.slane %v13, %v422
  %v424 = vadd.f32 %v419, %v423
  %v425 = vtanh.pop %v424
  %v426 = vlaneseq
  %v427 = vshrl.u32 %v426, 7
  %v428 = vsub.s32 3, %v427
  %v429 = vrot.slane %v13, %v428
  %v430 = vmul.f32 %v412, %v429
  %431 = vadd.xlane.f32.xlu0 %v430
  %v432 = vpop.xlane.xlu0 %431
  %v433 = vadd.f32 %v432, %v423
  %v434 = vtanh.pop %v433
  %v435 = vlaneseq
  %v436 = vand.u32 %v435, 127
  %vm437 = vcmp.eq.s32.totalorder %v436, 0
  %439 = vset.pattern.permute.xlu0 0
  %440 = vperm.xlu0 %439, %v425
  %v441 = vpop.permute.xlu0 %440
  %v443 = vsel %vm437, %v441, 0.0
  %vm444 = vcmp.eq.s32.totalorder %v436, 1
  %446 = vset.pattern.permute.xlu0 1
  %447 = vperm.xlu0 %446, %v434
  %v448 = vpop.permute.xlu0 %447
  %v450 = vsel %vm444, %v448, 0.0
  %v451 = vadd.f32 %v443, %v450
  %vm452 = vcmask 64512
  %453 = vst.msk [vmem:[%s2] sm:$0xff] %vm452, %v451
  // Predicated region
  $region10: #{hybrid_forward.1} parent=0 // pred_check
    _
  $region11: #{hybrid_forward.1} parent=0 // pred_check_branch
    %455 = sbr.rel (0) target = $region13
  $region12: #{hybrid_forward.1} parent=0 // pred_region
    _
  $region13: #{hybrid_forward.1} parent=0 // pred_fallthru
    _
  // Predicated region
  $region14: #{hybrid_forward.1} parent=0 // pred_check
    _
  $region15: #{hybrid_forward.1} parent=0 // pred_check_branch
    %457 = sbr.rel (0) target = $region17
  $region16: #{hybrid_forward.1} parent=0 // pred_region
    _
  $region17: #{hybrid_forward.1} parent=0 // pred_fallthru
    _

</llo_original>
